<compile_context>
chip_gen: v7x
topology: tpu7x:2x2x1
jax: 0.10.0
libtpu: 0.0.40
codegen_flags: <defaults>
</compile_context>

<pallas_src>
import jax
import jax.numpy as jnp
from jax.experimental import pallas as pl
from jax.experimental.pallas import tpu as pltpu


def _round_up(v, m):
    return ((v + m - 1) // m) * m


def _multi_tensorcore_chip():
    """Best-effort: True when each device has >1 TensorCore (v7x-class).

    Single-TC chips (v5e/v6e) want a single grid step (avoids per-step pipeline
    prologue/epilogue overhead); multi-TC chips benefit from 2 'parallel' steps.
    Detection failure just falls back to the single-step (always-correct) path.
    """
    try:
        kind = jax.devices()[0].device_kind.lower()
    except Exception:
        return False
    return "v7" in kind


def build_sym_kernel(weight, kernel_size, sym_type="lr"):
    """Reproduce the symmetric-kernel construction from Sym_ConvGeneral2d.forward.

    weight: (O, I, n_weights)  ->  full conv kernel (O, I, K, K)
    """
    k = kernel_size
    O, I, _ = weight.shape
    if sym_type == "lr":
        lim = k // 2 + k % 2
        left = weight.reshape(O, I, k, lim)                 # w_kernel[:, :, :, :lim]
        right_idx = list(reversed(range(lim - k % 2)))      # mirrored columns
        right = left[:, :, :, right_idx]
        return jnp.concatenate([left, right], axis=-1)      # (O, I, K, K)
    elif sym_type == "diag":
        # (only self-consistent for even k, matching the module's n_weights formula)
        r, c = jnp.triu_indices(k)
        U = jnp.zeros((O, I, k, k), weight.dtype).at[:, :, r, c].set(weight)
        eye = jnp.eye(k, dtype=weight.dtype)
        return U + jnp.swapaxes(U, 2, 3) - U * eye
    else:
        raise ValueError(f"unknown sym_type {sym_type}")


def _im2col_weights(w_oihw, Wp, OW, stride, compute_dtype):
    """Banded RHS stacked over kh: shape (K*Wp*C, OW*O) with
       W[kh*Wp*C + iw*C + c, ow*O + o] = w[o, c, kh, iw - ow*stride]  (0 outside band).
    """
    O, C, K, _ = w_oihw.shape
    w_hwio = jnp.transpose(w_oihw, (2, 3, 1, 0))            # (kh, kw, C, O)
    iw = jnp.arange(Wp)
    ow = jnp.arange(OW)
    kw = jnp.arange(K)
    band = (iw[:, None, None] == ow[None, :, None] * stride + kw[None, None, :])
    band = band.astype(w_hwio.dtype)                        # (Wp, OW, kw)
    w5 = jnp.einsum("wqk,hkco->hwcqo", band, w_hwio)        # (kh, Wp, C, OW, O)
    return w5.reshape(K * Wp * C, OW * O).astype(compute_dtype)


def sym_conv2d(x_nchw, weight, bias, kernel_size, stride=1, padding=0,
               sym_type="lr", compute_dtype=jnp.bfloat16):
    """Forward of Sym_ConvGeneral2d (transposed=False) with a single-matmul Pallas kernel."""
    K, S, P = kernel_size, stride, padding
    N, C, H, W = x_nchw.shape
    w_oihw = build_sym_kernel(weight, K, sym_type)          # (O, C, K, K)
    O = w_oihw.shape[0]
    OH = (H + 2 * P - K) // S + 1
    OW = (W + 2 * P - K) // S + 1
    Hp, Wp = H + 2 * P, W + 2 * P

    WC = Wp * C
    KWC = K * WC                                            # fused contraction (stacked K)
    OWO = OW * O                                            # fused output lanes
    KWC_pad = _round_up(KWC, 128)                           # 216 -> 256 (pad AFTER stacking)
    OWO_pad = _round_up(OWO, 128)

    # --- glue: NHWC, spatial pad, row-haloed im2col along H, fuse (kh, W, C) on lanes ---
    x = jnp.transpose(x_nchw, (0, 2, 3, 1))                 # NHWC
    x = jnp.pad(x, ((0, 0), (P, P), (P, P), (0, 0)))        # (N, Hp, Wp, C)
    x_rows = x.reshape(N, Hp, WC)
    oh_idx = jnp.arange(OH) * S
    # feature order: kh*WC + iw*C + c  (matches the banded RHS below)
    lhs = jnp.concatenate([x_rows[:, oh_idx + kh, :] for kh in range(K)], axis=-1)
    lhs = lhs.reshape(N * OH, KWC)                          # rows = n*OH + oh

    M = N * OH
    M_pad = _round_up(M, 8)
    lhs = jnp.pad(lhs, ((0, M_pad - M), (0, KWC_pad - KWC))).astype(compute_dtype)

    # --- banded weights: one lane-packed 2-D slab, kept resident in VMEM ---
    w_slab = _im2col_weights(w_oihw, Wp, OW, S, compute_dtype)
    w_slab = jnp.pad(w_slab, ((0, KWC_pad - KWC), (0, OWO_pad - OWO)))

    # bias tiled across OW on the fused output lanes; stays f32 (added post-accumulation)
    b_tiled = jnp.pad(jnp.tile(bias.astype(jnp.float32), OW), (0, OWO_pad - OWO))
    b_tiled = b_tiled.reshape(1, OWO_pad)

    # --- grid: 1 step on single-TC chips, 2 "parallel" row tiles on multi-TC (v7x) ---
    num_tiles = 1
    if _multi_tensorcore_chip() and M_pad >= 32 and M_pad % 16 == 0:
        num_tiles = 2                                       # one whole image per TensorCore here
    TM = M_pad // num_tiles
    out_dtype = x_nchw.dtype

    def conv_kernel(lhs_ref, w_ref, b_ref, o_ref):
        # lhs_ref: (TM, KWC_pad)  w_ref: (KWC_pad, OWO_pad)
        # b_ref:  (1, OWO_pad)    o_ref: (TM, OWO_pad)
        acc = jnp.dot(lhs_ref[...], w_ref[...],
                      preferred_element_type=jnp.float32)   # single MXU matmul
        o_ref[...] = (acc + b_ref[...]).astype(o_ref.dtype) # one f32 bias add, one store

    out_fused = pl.pallas_call(
        conv_kernel,
        out_shape=jax.ShapeDtypeStruct((M_pad, OWO_pad), out_dtype),
        grid=(num_tiles,),
        in_specs=[
            pl.BlockSpec((TM, KWC_pad), lambda t: (t, 0)),        # im2col rows per tile
            pl.BlockSpec((KWC_pad, OWO_pad), lambda t: (0, 0)),   # resident weights
            pl.BlockSpec((1, OWO_pad), lambda t: (0, 0)),         # resident bias
        ],
        out_specs=pl.BlockSpec((TM, OWO_pad), lambda t: (t, 0)),  # lane-dense output
        compiler_params=pltpu.CompilerParams(
            dimension_semantics=("parallel",),
            vmem_limit_bytes=32 * 1024 * 1024,
        ),
    )(lhs, w_slab, b_tiled)

    # --- un-fuse (OW, O) and return NCHW ---
    out = out_fused[:M, :OWO].reshape(N, OH, OW, O)
    return jnp.transpose(out, (0, 3, 1, 2))


if __name__ == "__main__":
    # Module config: Sym_ConvGeneral2d(in_channels=4, out_channels=8, kernel_size=3,
    #                                  stride=1, padding=1, sym_type='lr')
    N, C, H, W = 2, 4, 16, 16
    O, K, S, P = 8, 3, 1, 1
    sym_type = "lr"
    lim = K // 2 + K % 2
    n_weights = lim * K                                      # 'lr' formula from __init__

    key = jax.random.PRNGKey(0)
    k1, k2 = jax.random.split(key)
    weight = jax.random.normal(k1, (O, C, n_weights), dtype=jnp.float32)  # ~torch.randn
    bias = jnp.zeros((O,), dtype=jnp.float32)                # torch.zeros
    x = jax.random.normal(k2, (N, C, H, W), dtype=jnp.float32)

    y = sym_conv2d(x, weight, bias, K, stride=S, padding=P, sym_type=sym_type,
                   compute_dtype=jnp.bfloat16)
    y = jax.block_until_ready(y)
    assert y.shape == (N, O, H, W)

    # Pure-JAX reference (same symmetric kernel; same bf16-in / f32-accumulate numerics).
    wk = build_sym_kernel(weight, K, sym_type)
    y_ref = jax.lax.conv_general_dilated(
        x.astype(jnp.bfloat16), wk.astype(jnp.bfloat16),
        window_strides=(S, S), padding=[(P, P), (P, P)],
        dimension_numbers=("NCHW", "OIHW", "NCHW"),
        preferred_element_type=jnp.float32,
    ) + bias[None, :, None, None]
    max_err = float(jnp.max(jnp.abs(y - y_ref)))
    assert jnp.allclose(y, y_ref, atol=1e-2, rtol=1e-2), max_err

    print("KERNEL_OK")
</pallas_src>

<mosaic_0001>
module attributes {stable_mosaic.version = 11 : i64} {
  func.func @conv_kernel(%arg0: i32, %arg1: memref<32x256xbf16, #tpu.memory_space<vmem>>, %arg2: memref<256x128xbf16, #tpu.memory_space<vmem>>, %arg3: memref<1x128xf32, #tpu.memory_space<vmem>>, %arg4: memref<32x128xf32, #tpu.memory_space<vmem>>) attributes {dimension_semantics = [#tpu.dimension_semantics<parallel>], iteration_bounds = array<i64: 1>, scalar_prefetch = 0 : i64, scratch_operands = 0 : i64, tpu.core_type = #tpu.core_type<tc>, window_params = [{transform_indices = @transform_0, window_bounds = array<i64: 32, 256>}, {pipeline_mode = #tpu.pipeline_mode<synchronous>, transform_indices = @transform_1, window_bounds = array<i64: 256, 128>}, {pipeline_mode = #tpu.pipeline_mode<synchronous>, transform_indices = @transform_2, window_bounds = array<i64: 1, 128>}, {transform_indices = @transform_3, window_bounds = array<i64: 32, 128>}]} {
    %c0 = arith.constant 0 : index
    %c0_0 = arith.constant 0 : index
    %0 = vector.load %arg1[%c0, %c0_0] : memref<32x256xbf16, #tpu.memory_space<vmem>>, vector<32x256xbf16>
    %c0_1 = arith.constant 0 : index
    %c0_2 = arith.constant 0 : index
    %1 = vector.load %arg2[%c0_1, %c0_2] : memref<256x128xbf16, #tpu.memory_space<vmem>>, vector<256x128xbf16>
    %cst = arith.constant dense<0.000000e+00> : vector<32x128xf32>
    %2 = tpu.matmul %0, %1, %cst {dimension_numbers = #tpu.dot_dimension_numbers<[1], [0], [0], [1], [0, 0, 1, 1], [], []>} : vector<32x256xbf16>, vector<256x128xbf16>, vector<32x128xf32> -> vector<32x128xf32>
    %c0_3 = arith.constant 0 : index
    %c0_4 = arith.constant 0 : index
    %3 = vector.load %arg3[%c0_3, %c0_4] : memref<1x128xf32, #tpu.memory_space<vmem>>, vector<1x128xf32>
    %4 = vector.broadcast %3 : vector<1x128xf32> to vector<32x128xf32>
    %5 = arith.addf %2, %4 : vector<32x128xf32>
    %c0_5 = arith.constant 0 : index
    %c0_6 = arith.constant 0 : index
    %6 = vector.load %arg4[%c0_5, %c0_6] : memref<32x128xf32, #tpu.memory_space<vmem>>, vector<32x128xf32>
    tpu.vector_store %arg4[%c0_5, %c0_6], %5 {strides = array<i32>} : memref<32x128xf32, #tpu.memory_space<vmem>>, vector<32x128xf32>,
    return
  }
  func.func @transform_0(%arg0: i32) -> (i32, i32) {
    %c0_i32 = arith.constant 0 : i32
    %c0_i32_0 = arith.constant 0 : i32
    return %arg0, %c0_i32 : i32, i32
  }
  func.func @transform_1(%arg0: i32) -> (i32, i32) {
    %c0_i32 = arith.constant 0 : i32
    %c0_i32_0 = arith.constant 0 : i32
    %c0_i32_1 = arith.constant 0 : i32
    return %c0_i32, %c0_i32_0 : i32, i32
  }
  func.func @transform_2(%arg0: i32) -> (i32, i32) {
    %c0_i32 = arith.constant 0 : i32
    %c0_i32_0 = arith.constant 0 : i32
    %c0_i32_1 = arith.constant 0 : i32
    return %c0_i32, %c0_i32_0 : i32, i32
  }
  func.func @transform_3(%arg0: i32) -> (i32, i32) {
    %c0_i32 = arith.constant 0 : i32
    %c0_i32_0 = arith.constant 0 : i32
    return %arg0, %c0_i32 : i32, i32
  }
}

</mosaic_0001>

<llo_original>
// kernel: tpu_custom_call.1
$region0: #{tpu_custom_call.1}
  #allocation0 [shape = 'u32[]', space=smem, size = 0x4, offset = 0x4, fixed_abs, tag = 'smem constant byte address 0x4 - core index']
  #allocation1 [shape = 'u32[144,128]{1,0:T(1,128)}', space=vmem, size = 0x12000, scoped, tag = 'internal scratch']
  %s0 = inlined_call_operand.hbm [shape: bf16[32,256], index: 0, kind: input, shape index: {}]
  %s1 = inlined_call_operand.hbm [shape: bf16[256,128], index: 1, kind: input, shape index: {}]
  %s2 = inlined_call_operand.vmem [shape: f32[1,128], index: 2, kind: input, shape index: {}]
  %s3 = inlined_call_operand.hbm [shape: f32[32,128], index: 3, kind: output, shape index: {}]
  %s4 = sld [smem:[#allocation0]]
  $region30: #{tpu_custom_call.1} parent=0
    _
  %s6 = ssub.s32 1, %s4
  %s7 = scalar_select 0, %s6, %s4
  $region1: #{tpu_custom_call.1} parent=0
    #allocation2 [shape = 'u8[16384]{0}', space=vmem, size = 0x4000, scoped, tag = 'input window, operand 0, single buffered']
    #allocation3 [shape = 's32[1]{0}', space=sflag, size = 0x4, scoped, tag = 'scoped memory for tpu_custom_call.1']
    #allocation4 [shape = 's32[1]{0}', space=sflag, size = 0x4, scoped, tag = 'scoped memory for tpu_custom_call.1']
    #allocation5 [shape = 'u8[65536]{0}', space=vmem, size = 0x10000, scoped, tag = 'input window, operand 1, single buffered']
    #allocation6 [shape = 's32[1]{0}', space=sflag, size = 0x4, scoped, tag = 'scoped memory for tpu_custom_call.1']
    #allocation7 [shape = 'u8[16384]{0}', space=vmem, size = 0x4000, scoped, tag = 'output window, operand 0, single buffered']
    %8 = vsyncpa [#allocation3], 0
    %9 = vsyncpa [#allocation6], 0
    %10 = vsyncpa [#allocation4], 0
    // Predicated region
    $region2: #{tpu_custom_call.1} parent=1 // pred_check
      _
    $region3: #{tpu_custom_call.1} parent=1 // pred_check_branch
      %12 = sbr.rel (0) target = $region5
    $region4: #{tpu_custom_call.1} parent=1 // pred_region
      %s14 = ssub.s32 512, 512
      %15 = vsyncadd [#allocation3], %s14
      %s16 = sshll.u32 [#allocation2], 4
      %s17 = int_to_ptr.vmem [resolvable:$true] %s16
      %22 = dma.hbm_to_vmem [thread:$0]  %s0, 512, %s17, [#allocation3], 128, 128, 8
    $region5: #{tpu_custom_call.1} parent=1 // pred_fallthru
      _
    // Predicated region
    $region6: #{tpu_custom_call.1} parent=1 // pred_check
      _
    $region7: #{tpu_custom_call.1} parent=1 // pred_check_branch
      %24 = sbr.rel (0) target = $region9
    $region8: #{tpu_custom_call.1} parent=1 // pred_region
      %s26 = ssub.s32 2048, 2048
      %27 = vsyncadd [#allocation6], %s26
      %s28 = sshll.u32 [#allocation5], 4
      %s29 = int_to_ptr.vmem [resolvable:$true] %s28
      %34 = dma.hbm_to_vmem [thread:$0]  %s1, 2048, %s29, [#allocation6], 64, 64, 4
    $region9: #{tpu_custom_call.1} parent=1 // pred_fallthru
      _
    // Predicated region
    $region10: #{tpu_custom_call.1} parent=1 // pred_check
      _
    $region11: #{tpu_custom_call.1} parent=1 // pred_check_branch
      %36 = sbr.rel (0) target = $region13
    $region12: #{tpu_custom_call.1} parent=1 // pred_region
      _
    $region13: #{tpu_custom_call.1} parent=1 // pred_fallthru
      _
    // Predicated region
    $region14: #{tpu_custom_call.1} parent=1 // pred_check
      _
    $region15: #{tpu_custom_call.1} parent=1 // pred_check_branch
      %38 = sbr.rel (0) target = $region17
    $region16: #{tpu_custom_call.1} parent=1 // pred_region
      %39 = dma.done [#allocation3], 512
    $region17: #{tpu_custom_call.1} parent=1 // pred_fallthru
      _
    // Predicated region
    $region18: #{tpu_custom_call.1} parent=1 // pred_check
      _
    $region19: #{tpu_custom_call.1} parent=1 // pred_check_branch
      %41 = sbr.rel (0) target = $region21
    $region20: #{tpu_custom_call.1} parent=1 // pred_region
      %42 = dma.done [#allocation6], 2048
    $region21: #{tpu_custom_call.1} parent=1 // pred_fallthru
      _
    %v44 = vld [vmem:[#allocation2] sm:$0xff]
    %v45 = vld [vmem:[#allocation2 + $0x8] sm:$0xff]
    %v46 = vld [vmem:[#allocation2 + $0x10] sm:$0xff]
    %v47 = vld [vmem:[#allocation2 + $0x18] sm:$0xff]
    %v48 = vld [vmem:[#allocation5] sm:$0xf]
    %v49 = vld [vmem:[#allocation5 + $0x4] sm:$0xf]
    %v50 = vld [vmem:[#allocation5 + $0x8] sm:$0xf]
    %v51 = vld [vmem:[#allocation5 + $0xc] sm:$0xf]
    %v52 = vld [vmem:[#allocation5 + $0x10] sm:$0xf]
    %v53 = vld [vmem:[#allocation5 + $0x14] sm:$0xf]
    %v54 = vld [vmem:[#allocation5 + $0x18] sm:$0xf]
    %v55 = vld [vmem:[#allocation5 + $0x1c] sm:$0xf]
    %v56 = vld [vmem:[#allocation5 + $0x20] sm:$0xf]
    %v57 = vld [vmem:[#allocation5 + $0x24] sm:$0xf]
    %v58 = vld [vmem:[#allocation5 + $0x28] sm:$0xf]
    %v59 = vld [vmem:[#allocation5 + $0x2c] sm:$0xf]
    %v60 = vld [vmem:[#allocation5 + $0x30] sm:$0xf]
    %v61 = vld [vmem:[#allocation5 + $0x34] sm:$0xf]
    %v62 = vld [vmem:[#allocation5 + $0x38] sm:$0xf]
    %v63 = vld [vmem:[#allocation5 + $0x3c] sm:$0xf]
    %v64 = vld [vmem:[#allocation5 + $0x40] sm:$0xf]
    %v65 = vld [vmem:[#allocation5 + $0x44] sm:$0xf]
    %v66 = vld [vmem:[#allocation5 + $0x48] sm:$0xf]
    %v67 = vld [vmem:[#allocation5 + $0x4c] sm:$0xf]
    %v68 = vld [vmem:[#allocation5 + $0x50] sm:$0xf]
    %v69 = vld [vmem:[#allocation5 + $0x54] sm:$0xf]
    %v70 = vld [vmem:[#allocation5 + $0x58] sm:$0xf]
    %v71 = vld [vmem:[#allocation5 + $0x5c] sm:$0xf]
    %v72 = vld [vmem:[#allocation5 + $0x60] sm:$0xf]
    %v73 = vld [vmem:[#allocation5 + $0x64] sm:$0xf]
    %v74 = vld [vmem:[#allocation5 + $0x68] sm:$0xf]
    %v75 = vld [vmem:[#allocation5 + $0x6c] sm:$0xf]
    %v76 = vld [vmem:[#allocation5 + $0x70] sm:$0xf]
    %v77 = vld [vmem:[#allocation5 + $0x74] sm:$0xf]
    %v78 = vld [vmem:[#allocation5 + $0x78] sm:$0xf]
    %v79 = vld [vmem:[#allocation5 + $0x7c] sm:$0xf]
    %v80 = vld [vmem:[%s2] sm:$0x1]
    %v82 = vlaneseq
    %v83 = vshrl.u32 %v82, 7
    %v84 = vsub.s32 0, %v83
    %v85 = vrot.slane %v80, %v84
    %v91 = vunpack.c.l.b16 %v44
    %v92 = vunpack.c.h.b16 %v44
    %v93 = vunpack.c.l.b16 %v45
    %v94 = vunpack.c.h.b16 %v45
    %v95 = vunpack.c.l.b16 %v46
    %v96 = vunpack.c.h.b16 %v46
    %v97 = vunpack.c.l.b16 %v47
    %v98 = vunpack.c.h.b16 %v47
    %v99 = vpack.c.b16 %v93, %v91
    %v100 = vpack.c.b16 %v94, %v92
    %v101 = vpack.c.b16 %v97, %v95
    %v102 = vpack.c.b16 %v98, %v96
    %v139 = vunpack.c.l.b16 %v48
    %v140 = vunpack.c.l.b16 %v49
    %v141 = vunpack.c.l.b16 %v50
    %v142 = vunpack.c.l.b16 %v51
    %v143 = vunpack.c.l.b16 %v52
    %v144 = vunpack.c.l.b16 %v53
    %v145 = vunpack.c.l.b16 %v54
    %v146 = vunpack.c.l.b16 %v55
    %v147 = vunpack.c.l.b16 %v56
    %v148 = vunpack.c.l.b16 %v57
    %v149 = vunpack.c.l.b16 %v58
    %v150 = vunpack.c.l.b16 %v59
    %v151 = vunpack.c.l.b16 %v60
    %v152 = vunpack.c.l.b16 %v61
    %v153 = vunpack.c.l.b16 %v62
    %v154 = vunpack.c.l.b16 %v63
    %v155 = vunpack.c.l.b16 %v64
    %v156 = vunpack.c.l.b16 %v65
    %v157 = vunpack.c.l.b16 %v66
    %v158 = vunpack.c.l.b16 %v67
    %v159 = vunpack.c.l.b16 %v68
    %v160 = vunpack.c.l.b16 %v69
    %v161 = vunpack.c.l.b16 %v70
    %v162 = vunpack.c.l.b16 %v71
    %v163 = vunpack.c.l.b16 %v72
    %v164 = vunpack.c.l.b16 %v73
    %v165 = vunpack.c.l.b16 %v74
    %v166 = vunpack.c.l.b16 %v75
    %v167 = vunpack.c.l.b16 %v76
    %v168 = vunpack.c.l.b16 %v77
    %v169 = vunpack.c.l.b16 %v78
    %v170 = vunpack.c.l.b16 %v79
    %v171 = vpack.c.b16 %v140, %v139
    %v172 = vpack.c.b16 %v142, %v141
    %v173 = vpack.c.b16 %v144, %v143
    %v174 = vpack.c.b16 %v146, %v145
    %v175 = vpack.c.b16 %v148, %v147
    %v176 = vpack.c.b16 %v150, %v149
    %v177 = vpack.c.b16 %v152, %v151
    %v178 = vpack.c.b16 %v154, %v153
    %v179 = vpack.c.b16 %v156, %v155
    %v180 = vpack.c.b16 %v158, %v157
    %v181 = vpack.c.b16 %v160, %v159
    %v182 = vpack.c.b16 %v162, %v161
    %v183 = vpack.c.b16 %v164, %v163
    %v184 = vpack.c.b16 %v166, %v165
    %v185 = vpack.c.b16 %v168, %v167
    %v186 = vpack.c.b16 %v170, %v169
    %203 = vmatprep.subr.bf16.mxu0 0
    %204 = vmatpush1.bf16.msra.mxu0 %v171
    %205 = vmatprep.subr.bf16.mxu0 0
    %206 = vmatpush1.bf16.msra.mxu0 %v172
    %207 = vmatprep.subr.bf16.mxu0 0
    %208 = vmatpush1.bf16.msra.mxu0 %v173
    %209 = vmatprep.subr.bf16.mxu0 0
    %210 = vmatpush1.bf16.msra.mxu0 %v174
    %211 = vmatprep.subr.bf16.mxu0 0
    %212 = vmatpush1.bf16.msra.mxu0 %v175
    %213 = vmatprep.subr.bf16.mxu0 0
    %214 = vmatpush1.bf16.msra.mxu0 %v176
    %215 = vmatprep.subr.bf16.mxu0 0
    %216 = vmatpush1.bf16.msra.mxu0 %v177
    %217 = vmatprep.subr.bf16.mxu0 0
    %218 = vmatpush1.bf16.msra.mxu0 %v178
    %219 = vmatprep.subr.bf16.mxu0 0
    %220 = vmatpush1.bf16.msra.mxu0 %v179
    %221 = vmatprep.subr.bf16.mxu0 0
    %222 = vmatpush1.bf16.msra.mxu0 %v180
    %223 = vmatprep.subr.bf16.mxu0 0
    %224 = vmatpush1.bf16.msra.mxu0 %v181
    %225 = vmatprep.subr.bf16.mxu0 0
    %226 = vmatpush1.bf16.msra.mxu0 %v182
    %227 = vmatprep.subr.bf16.mxu0 0
    %228 = vmatpush1.bf16.msra.mxu0 %v183
    %229 = vmatprep.subr.bf16.mxu0 0
    %230 = vmatpush1.bf16.msra.mxu0 %v184
    %231 = vmatprep.subr.bf16.mxu0 0
    %232 = vmatpush1.bf16.msra.mxu0 %v185
    %233 = vmatprep.subr.bf16.mxu0 0
    %234 = vmatpush1.bf16.msra.mxu0 %v186
    %235 = vmatprep.mubr.bf16.mxu0 %v100
    %236 = vmatmul.mubr.bf16.gmra.mrb[0].mxu0 %v99
    %v237 = vpop.f32.mrb[0].mxu0
    %v238 = vadd.f32 %v85, %v237
    %v239 = vpop.f32.mrb[0].mxu0
    %v240 = vpop.f32.mrb[0].mxu0
    %v241 = vadd.f32 %v85, %v240
    %v242 = vpop.f32.mrb[0].mxu0
    %243 = vmatprep.mubr.bf16.mxu0 %v102
    %244 = vmatmul.mubr.bf16.gmra.mrb[0].mxu0 %v101
    %v245 = vpop.f32.mrb[0].mxu0
    %v246 = vadd.f32 %v85, %v245
    %v247 = vpop.f32.mrb[0].mxu0
    %v248 = vpop.f32.mrb[0].mxu0
    %v249 = vadd.f32 %v85, %v248
    %v250 = vpop.f32.mrb[0].mxu0
    %251 = vdwg.mxu0
    %252 = vst [vmem:[#allocation7] sm:$0xff] %v238
    %253 = vst [vmem:[#allocation7 + $0x8] sm:$0xff] %v241
    %254 = vst [vmem:[#allocation7 + $0x10] sm:$0xff] %v246
    %255 = vst [vmem:[#allocation7 + $0x18] sm:$0xff] %v249
    // Predicated region
    $region22: #{tpu_custom_call.1} parent=1 // pred_check
      _
    $region23: #{tpu_custom_call.1} parent=1 // pred_check_branch
      %257 = sbr.rel (0) target = $region25
    $region24: #{tpu_custom_call.1} parent=1 // pred_region
      %s259 = ssub.s32 512, 512
      %260 = vsyncadd [#allocation4], %s259
      %s261 = sshll.u32 [#allocation7], 4
      %s262 = int_to_ptr.vmem [resolvable:$true] %s261
      %267 = dma.vmem_to_hbm [thread:$0]  %s262, 512, %s3, [#allocation4], 128, 128, 8
    $region25: #{tpu_custom_call.1} parent=1 // pred_fallthru
      _
    // Predicated region
    $region26: #{tpu_custom_call.1} parent=1 // pred_check
      _
    $region27: #{tpu_custom_call.1} parent=1 // pred_check_branch
      %269 = sbr.rel (0) target = $region29
    $region28: #{tpu_custom_call.1} parent=1 // pred_region
      %270 = dma.done [#allocation4], 512
    $region29: #{tpu_custom_call.1} parent=1 // pred_fallthru
      _
    %271 = vsyncpa [#allocation3], 1
    %272 = vsyncpa [#allocation6], 1
    %273 = vsyncpa [#allocation4], 1

</llo_original>
